<compile_context>
chip_gen: v7x
topology: tpu7x:2x2x1
jax: 0.10.0
libtpu: 0.0.40
codegen_flags: <defaults>
</compile_context>

<pallas_src>
import math

import jax
import jax.numpy as jnp
from jax.experimental import pallas as pl
from jax.experimental.pallas import tpu as pltpu

LANES = 128        # lane tile
HIDDEN_MLP = 64    # inner width of strategy_selector
OUT_DIM = 3        # number of strategies (logits width)


def _round_up(n: int, m: int) -> int:
    return ((n + m - 1) // m) * m


def _strategy_selector_kernel(x_ref, w1_ref, b1_ref, w2_ref, b2_ref, out_ref):
    # Fused Linear -> ReLU -> Linear.
    #  * x arrives unpadded (full-array block); weights are lane-padded bf16.
    #  * Matmuls run bf16 x bf16 on the MXU with f32 accumulation.
    #  * Bias add + ReLU stay f32 on the VPU (v5e VPU has no bf16 anyway).
    #  * Output slab is (B, 128): lane-dense, unmasked store in the lane dim.
    x = x_ref[...].astype(jnp.bfloat16)
    h = jnp.dot(x, w1_ref[...], preferred_element_type=jnp.float32)
    h = jnp.maximum(h + b1_ref[...], 0.0)
    o = jnp.dot(h.astype(jnp.bfloat16), w2_ref[...],
                preferred_element_type=jnp.float32)
    out_ref[...] = o + b2_ref[...]


@jax.jit
def _strategy_logits_jit(x, w1_p, b1_p, w2_p, b2_p):
    """Run the fused MLP kernel and slice the padded logits back (fused by XLA)."""
    B, H = x.shape
    N1p = w1_p.shape[1]
    N2p = w2_p.shape[1]
    vmem = pltpu.MemorySpace.VMEM

    out_p = pl.pallas_call(
        _strategy_selector_kernel,
        out_shape=jax.ShapeDtypeStruct((B, N2p), jnp.float32),
        in_specs=[
            pl.BlockSpec((B, H), lambda: (0, 0), memory_space=vmem),     # full array
            pl.BlockSpec((H, N1p), lambda: (0, 0), memory_space=vmem),
            pl.BlockSpec((1, N1p), lambda: (0, 0), memory_space=vmem),
            pl.BlockSpec((N1p, N2p), lambda: (0, 0), memory_space=vmem),
            pl.BlockSpec((1, N2p), lambda: (0, 0), memory_space=vmem),
        ],
        out_specs=pl.BlockSpec((B, N2p), lambda: (0, 0), memory_space=vmem),
    )(x, w1_p, b1_p, w2_p, b2_p)

    # Slice stays inside this jit — no separate dispatch / HBM round trip.
    return out_p[:, :OUT_DIM]


def _torch_linear_init(key, fan_in, fan_out, dtype=jnp.float32):
    """Deterministic init mimicking nn.Linear defaults (uniform(-1/sqrt(fan_in), ...)).

    PyTorch stores weight as [out, in]; we store it transposed [in, out] so the
    kernel computes x @ W directly.
    """
    kw, kb = jax.random.split(key)
    bound = 1.0 / math.sqrt(fan_in)
    w = jax.random.uniform(kw, (fan_in, fan_out), dtype, -bound, bound)
    b = jax.random.uniform(kb, (1, fan_out), dtype, -bound, bound)
    return w, b


class MetaControllerPallas:
    """JAX/Pallas port of MetaController (forward pass only)."""

    def __init__(self, hidden_size: int, key):
        k1, k2 = jax.random.split(key)
        # Unpadded f32 parameters (logical shapes, used for reference checks).
        self.w1, self.b1 = _torch_linear_init(k1, hidden_size, HIDDEN_MLP)
        self.w2, self.b2 = _torch_linear_init(k2, HIDDEN_MLP, OUT_DIM)

        # Lane-padded copies, built once at init so the hot path never repads:
        #   w1: (H, 64)  -> (H, 128)   bf16   (halves weight DMA, native MXU path)
        #   w2: (64, 3)  -> (128, 128) bf16
        #   b1/b2 stay f32 (VPU bias add is f32).
        # Padding is zeros, so padded lanes of the logits are exactly 0 and are
        # sliced off inside the jit.
        n1p = _round_up(HIDDEN_MLP, LANES)
        n2p = _round_up(OUT_DIM, LANES)
        bf16, f32 = jnp.bfloat16, jnp.float32
        self.w1_p = (jnp.zeros((hidden_size, n1p), f32)
                     .at[:, :HIDDEN_MLP].set(self.w1)).astype(bf16)
        self.b1_p = jnp.zeros((1, n1p), f32).at[:, :HIDDEN_MLP].set(self.b1)
        self.w2_p = (jnp.zeros((n1p, n2p), f32)
                     .at[:HIDDEN_MLP, :OUT_DIM].set(self.w2)).astype(bf16)
        self.b2_p = jnp.zeros((1, n2p), f32).at[:, :OUT_DIM].set(self.b2)

    def strategy_logits(self, state_representation):
        """strategy_selector MLP: Linear(H,64) -> ReLU -> Linear(64,3)."""
        return _strategy_logits_jit(
            state_representation, self.w1_p, self.b1_p, self.w2_p, self.b2_p)

    def forward(self, state_representation):
        # Matches the PyTorch reference exactly: the decision logic is not yet
        # wired in and the reference never evaluates strategy_selector here, so
        # we do NOT dispatch the kernel (the result would be discarded — dead
        # device work). Call strategy_logits() directly when logits are needed.
        # TODO(synk): hook strategy_logits() in once the decision logic
        # ("sera développée ultérieurement") lands upstream.
        return {'task_type': 'base'}


if __name__ == "__main__":
    key = jax.random.PRNGKey(0)
    k_params, k_state = jax.random.split(key)

    hidden_size = 32   # config.model_config.hidden_size
    batch = 2

    ctrl = MetaControllerPallas(hidden_size, k_params)
    state = jax.random.normal(k_state, (batch, hidden_size), dtype=jnp.float32)

    # Exercise the Pallas kernel once (the module's only parameterized compute).
    logits = ctrl.strategy_logits(state)
    jax.block_until_ready(logits)
    assert logits.shape == (batch, OUT_DIM)

    # Tight check against a plain-JAX emulation using the same bf16 padded weights.
    xb = state.astype(jnp.bfloat16)
    h_ref = jnp.maximum(
        jnp.dot(xb, ctrl.w1_p, preferred_element_type=jnp.float32) + ctrl.b1_p, 0.0)
    ref_bf16 = (jnp.dot(h_ref.astype(jnp.bfloat16), ctrl.w2_p,
                        preferred_element_type=jnp.float32) + ctrl.b2_p)[:, :OUT_DIM]
    assert jnp.allclose(logits, ref_bf16, atol=2e-3, rtol=2e-3)

    # Loose check against the full-precision f32 reference (bf16 weight quantization).
    ref_f32 = jnp.maximum(state @ ctrl.w1 + ctrl.b1, 0.0) @ ctrl.w2 + ctrl.b2
    assert jnp.allclose(logits, ref_f32, atol=1e-1, rtol=1e-1)

    # forward() keeps the reference semantics (no device work, default decision).
    decision = ctrl.forward(state)
    assert decision == {'task_type': 'base'}

    print("KERNEL_OK")
</pallas_src>

<mosaic_0001>
module attributes {stable_mosaic.version = 11 : i64} {
  func.func @_strategy_selector_kernel(%arg0: memref<2x32xf32, #tpu.memory_space<vmem>>, %arg1: memref<32x128xbf16, #tpu.memory_space<vmem>>, %arg2: memref<1x128xf32, #tpu.memory_space<vmem>>, %arg3: memref<128x128xbf16, #tpu.memory_space<vmem>>, %arg4: memref<1x128xf32, #tpu.memory_space<vmem>>, %arg5: memref<2x128xf32, #tpu.memory_space<vmem>>) attributes {dimension_semantics = [], scalar_prefetch = 0 : i64, scratch_operands = 0 : i64, tpu.core_type = #tpu.core_type<tc>} {
    %c0 = arith.constant 0 : index
    %c0_0 = arith.constant 0 : index
    %0 = vector.load %arg0[%c0, %c0_0] : memref<2x32xf32, #tpu.memory_space<vmem>>, vector<2x32xf32>
    %1 = arith.truncf %0 : vector<2x32xf32> to vector<2x32xbf16>
    %c0_1 = arith.constant 0 : index
    %c0_2 = arith.constant 0 : index
    %2 = vector.load %arg1[%c0_1, %c0_2] : memref<32x128xbf16, #tpu.memory_space<vmem>>, vector<32x128xbf16>
    %cst = arith.constant dense<0.000000e+00> : vector<2x128xf32>
    %3 = tpu.matmul %1, %2, %cst {dimension_numbers = #tpu.dot_dimension_numbers<[1], [0], [0], [1], [0, 0, 1, 1], [], []>} : vector<2x32xbf16>, vector<32x128xbf16>, vector<2x128xf32> -> vector<2x128xf32>
    %c0_3 = arith.constant 0 : index
    %c0_4 = arith.constant 0 : index
    %4 = vector.load %arg2[%c0_3, %c0_4] : memref<1x128xf32, #tpu.memory_space<vmem>>, vector<1x128xf32>
    %5 = vector.broadcast %4 : vector<1x128xf32> to vector<2x128xf32>
    %6 = arith.addf %3, %5 : vector<2x128xf32>
    %cst_5 = arith.constant 0.000000e+00 : f32
    %7 = vector.broadcast %cst_5 : f32 to vector<2x128xf32>
    %8 = arith.maximumf %6, %7 : vector<2x128xf32>
    %9 = arith.truncf %8 : vector<2x128xf32> to vector<2x128xbf16>
    %c0_6 = arith.constant 0 : index
    %c0_7 = arith.constant 0 : index
    %10 = vector.load %arg3[%c0_6, %c0_7] : memref<128x128xbf16, #tpu.memory_space<vmem>>, vector<128x128xbf16>
    %cst_8 = arith.constant dense<0.000000e+00> : vector<2x128xf32>
    %11 = tpu.matmul %9, %10, %cst_8 {dimension_numbers = #tpu.dot_dimension_numbers<[1], [0], [0], [1], [0, 0, 1, 1], [], []>} : vector<2x128xbf16>, vector<128x128xbf16>, vector<2x128xf32> -> vector<2x128xf32>
    %c0_9 = arith.constant 0 : index
    %c0_10 = arith.constant 0 : index
    %12 = vector.load %arg4[%c0_9, %c0_10] : memref<1x128xf32, #tpu.memory_space<vmem>>, vector<1x128xf32>
    %13 = vector.broadcast %12 : vector<1x128xf32> to vector<2x128xf32>
    %14 = arith.addf %11, %13 : vector<2x128xf32>
    %c0_11 = arith.constant 0 : index
    %c0_12 = arith.constant 0 : index
    %15 = vector.load %arg5[%c0_11, %c0_12] : memref<2x128xf32, #tpu.memory_space<vmem>>, vector<2x128xf32>
    tpu.vector_store %arg5[%c0_11, %c0_12], %14 {strides = array<i32>} : memref<2x128xf32, #tpu.memory_space<vmem>>, vector<2x128xf32>,
    return
  }
}

</mosaic_0001>

<llo_original>
// kernel: _strategy_logits_jit.1
$region0: #{_strategy_logits_jit.1}
  #allocation0 [shape = 'u32[]', space=smem, size = 0x4, offset = 0x4, fixed_abs, tag = 'smem constant byte address 0x4 - core index']
  #allocation1 [shape = 'u32[144,128]{1,0:T(1,128)}', space=vmem, size = 0x12000, scoped, tag = 'internal scratch']
  %s0 = inlined_call_operand.hbm [shape: f32[2,32], index: 0, kind: input, shape index: {}]
  %s1 = inlined_call_operand.hbm [shape: bf16[32,128], index: 1, kind: input, shape index: {}]
  %s2 = inlined_call_operand.vmem [shape: f32[1,128], index: 2, kind: input, shape index: {}]
  %s3 = inlined_call_operand.hbm [shape: bf16[128,128], index: 3, kind: input, shape index: {}]
  %s4 = inlined_call_operand.vmem [shape: f32[1,128], index: 4, kind: input, shape index: {}]
  %s5 = inlined_call_operand.hbm [shape: f32[2,128], index: 5, kind: output, shape index: {}]
  %s6 = sld [smem:[#allocation0]]
  $region42: #{_strategy_logits_jit.1} parent=0
    _
  %s8 = ssub.s32 1, %s6
  %s9 = scalar_select 0, %s8, %s6
  $region1: #{_strategy_logits_jit.1} parent=0
    #allocation2 [shape = 'u8[1024]{0}', space=vmem, size = 0x400, scoped, tag = 'input window, operand 0, single buffered']
    #allocation3 [shape = 's32[1]{0}', space=sflag, size = 0x4, scoped, tag = 'scoped memory for _strategy_logits_jit.1']
    #allocation4 [shape = 's32[1]{0}', space=sflag, size = 0x4, scoped, tag = 'scoped memory for _strategy_logits_jit.1']
    #allocation5 [shape = 'u8[8192]{0}', space=vmem, size = 0x2000, scoped, tag = 'input window, operand 1, single buffered']
    #allocation6 [shape = 's32[1]{0}', space=sflag, size = 0x4, scoped, tag = 'scoped memory for _strategy_logits_jit.1']
    #allocation7 [shape = 'u8[32768]{0}', space=vmem, size = 0x8000, scoped, tag = 'input window, operand 3, single buffered']
    #allocation8 [shape = 'u8[1024]{0}', space=vmem, size = 0x400, scoped, tag = 'output window, operand 0, single buffered']
    %10 = vsyncpa [#allocation3], 0
    %11 = vsyncpa [#allocation6], 0
    %12 = vsyncpa [#allocation4], 0
    // Predicated region
    $region2: #{_strategy_logits_jit.1} parent=1 // pred_check
      _
    $region3: #{_strategy_logits_jit.1} parent=1 // pred_check_branch
      %14 = sbr.rel (0) target = $region5
    $region4: #{_strategy_logits_jit.1} parent=1 // pred_region
      %s16 = ssub.s32 32, 32
      %17 = vsyncadd [#allocation3], %s16
      %s19 = sshll.u32 [#allocation2], 4
      %s20 = int_to_ptr.vmem [resolvable:$true] %s19
      %22 = dma.hbm_to_vmem [thread:$0]  %s0, 32, %s20, [#allocation3]
    $region5: #{_strategy_logits_jit.1} parent=1 // pred_fallthru
      _
    // Predicated region
    $region6: #{_strategy_logits_jit.1} parent=1 // pred_check
      _
    $region7: #{_strategy_logits_jit.1} parent=1 // pred_check_branch
      %24 = sbr.rel (0) target = $region9
    $region8: #{_strategy_logits_jit.1} parent=1 // pred_region
      %s26 = ssub.s32 256, 256
      %27 = vsyncadd [#allocation6], %s26
      %s28 = sshll.u32 [#allocation5], 4
      %s29 = int_to_ptr.vmem [resolvable:$true] %s28
      %34 = dma.hbm_to_vmem [thread:$0]  %s1, 256, %s29, [#allocation6], 64, 64, 4
    $region9: #{_strategy_logits_jit.1} parent=1 // pred_fallthru
      _
    // Predicated region
    $region10: #{_strategy_logits_jit.1} parent=1 // pred_check
      _
    $region11: #{_strategy_logits_jit.1} parent=1 // pred_check_branch
      %36 = sbr.rel (0) target = $region13
    $region12: #{_strategy_logits_jit.1} parent=1 // pred_region
      _
    $region13: #{_strategy_logits_jit.1} parent=1 // pred_fallthru
      _
    // Predicated region
    $region14: #{_strategy_logits_jit.1} parent=1 // pred_check
      _
    $region15: #{_strategy_logits_jit.1} parent=1 // pred_check_branch
      %38 = sbr.rel (0) target = $region17
    $region16: #{_strategy_logits_jit.1} parent=1 // pred_region
      %s40 = ssub.s32 1024, 1024
      %41 = vsyncadd [#allocation6], %s40
      %s42 = sshll.u32 [#allocation7], 4
      %s43 = int_to_ptr.vmem [resolvable:$true] %s42
      %48 = dma.hbm_to_vmem [thread:$0]  %s3, 1024, %s43, [#allocation6], 64, 64, 4
    $region17: #{_strategy_logits_jit.1} parent=1 // pred_fallthru
      _
    // Predicated region
    $region18: #{_strategy_logits_jit.1} parent=1 // pred_check
      _
    $region19: #{_strategy_logits_jit.1} parent=1 // pred_check_branch
      %50 = sbr.rel (0) target = $region21
    $region20: #{_strategy_logits_jit.1} parent=1 // pred_region
      _
    $region21: #{_strategy_logits_jit.1} parent=1 // pred_fallthru
      _
    // Predicated region
    $region22: #{_strategy_logits_jit.1} parent=1 // pred_check
      _
    $region23: #{_strategy_logits_jit.1} parent=1 // pred_check_branch
      %52 = sbr.rel (0) target = $region25
    $region24: #{_strategy_logits_jit.1} parent=1 // pred_region
      %53 = dma.done [#allocation3], 32
    $region25: #{_strategy_logits_jit.1} parent=1 // pred_fallthru
      _
    // Predicated region
    $region26: #{_strategy_logits_jit.1} parent=1 // pred_check
      _
    $region27: #{_strategy_logits_jit.1} parent=1 // pred_check_branch
      %55 = sbr.rel (0) target = $region29
    $region28: #{_strategy_logits_jit.1} parent=1 // pred_region
      %56 = dma.done [#allocation6], 256
    $region29: #{_strategy_logits_jit.1} parent=1 // pred_fallthru
      _
    // Predicated region
    $region30: #{_strategy_logits_jit.1} parent=1 // pred_check
      _
    $region31: #{_strategy_logits_jit.1} parent=1 // pred_check_branch
      %58 = sbr.rel (0) target = $region33
    $region32: #{_strategy_logits_jit.1} parent=1 // pred_region
      %59 = dma.done [#allocation6], 1024
    $region33: #{_strategy_logits_jit.1} parent=1 // pred_fallthru
      _
    %v61 = vld [vmem:[#allocation2] sm:$0x3]
    %v62 = vpack.c.bf16 %v61, %v61
    %v63 = vld [vmem:[#allocation5] sm:$0xf]
    %v64 = vld [vmem:[#allocation5 + $0x4] sm:$0xf]
    %v65 = vld [vmem:[#allocation5 + $0x8] sm:$0xf]
    %v66 = vld [vmem:[#allocation5 + $0xc] sm:$0xf]
    %v67 = vld [vmem:[%s2] sm:$0x1]
    %v69 = vlaneseq
    %v70 = vshrl.u32 %v69, 7
    %v71 = vsub.s32 0, %v70
    %v72 = vrot.slane %v67, %v71
    %v78 = vunpack.c.l.b16 %v63
    %v79 = vunpack.c.l.b16 %v64
    %v80 = vunpack.c.l.b16 %v65
    %v81 = vunpack.c.l.b16 %v66
    %v82 = vpack.c.b16 %v79, %v78
    %v83 = vpack.c.b16 %v81, %v80
    %vm86 = vcmask 261120
    %v88 = vsel %vm86, %v62, 0
    %90 = vmatprep.subr.bf16.mxu0 0
    %91 = vmatpush1.bf16.msra.mxu0 %v82
    %92 = vmatprep.subr.bf16.mxu0 0
    %93 = vmatpush1.bf16.msra.mxu0 %v83
    %94 = vmatprep.subr.bf16.mxu0 0
    %95 = vmatpush1.bf16.msra.mxu0 0
    %96 = vmatprep.subr.bf16.mxu0 0
    %97 = vmatpush1.bf16.msra.mxu0 0
    %98 = vmatprep.subr.bf16.mxu0 0
    %99 = vmatpush1.bf16.msra.mxu0 0
    %100 = vmatprep.subr.bf16.mxu0 0
    %101 = vmatpush1.bf16.msra.mxu0 0
    %102 = vmatprep.subr.bf16.mxu0 0
    %103 = vmatpush1.bf16.msra.mxu0 0
    %104 = vmatprep.subr.bf16.mxu0 0
    %105 = vmatpush1.bf16.msra.mxu0 0
    %106 = vmatprep.subr.bf16.mxu0 0
    %107 = vmatpush1.bf16.msra.mxu0 0
    %108 = vmatprep.subr.bf16.mxu0 0
    %109 = vmatpush1.bf16.msra.mxu0 0
    %110 = vmatprep.subr.bf16.mxu0 0
    %111 = vmatpush1.bf16.msra.mxu0 0
    %112 = vmatprep.subr.bf16.mxu0 0
    %113 = vmatpush1.bf16.msra.mxu0 0
    %114 = vmatprep.subr.bf16.mxu0 0
    %115 = vmatpush1.bf16.msra.mxu0 0
    %116 = vmatprep.subr.bf16.mxu0 0
    %117 = vmatpush1.bf16.msra.mxu0 0
    %118 = vmatprep.subr.bf16.mxu0 0
    %119 = vmatpush1.bf16.msra.mxu0 0
    %120 = vmatprep.subr.bf16.mxu0 0
    %121 = vmatpush1.bf16.msra.mxu0 0
    %122 = vmatprep.mubr.bf16.mxu0 0
    %123 = vmatmul.mubr.bf16.gmra.mrb[0].mxu0 %v88
    %v124 = vpop.f32.mrb[0].mxu0
    %v125 = vadd.f32 %v72, %v124
    %v126 = vpop.f32.mrb[0].mxu0
    %v127 = vpop.f32.mrb[0].mxu0
    %v128 = vpop.f32.mrb[0].mxu0
    %129 = vdwg.mxu0
    %v130 = vmax.f32 %v125, 0.0
    %v131 = vpack.c.bf16 %v130, %v130
    %v132 = vld [vmem:[#allocation7] sm:$0xf]
    %v133 = vld [vmem:[#allocation7 + $0x4] sm:$0xf]
    %v134 = vld [vmem:[#allocation7 + $0x8] sm:$0xf]
    %v135 = vld [vmem:[#allocation7 + $0xc] sm:$0xf]
    %v136 = vld [vmem:[#allocation7 + $0x10] sm:$0xf]
    %v137 = vld [vmem:[#allocation7 + $0x14] sm:$0xf]
    %v138 = vld [vmem:[#allocation7 + $0x18] sm:$0xf]
    %v139 = vld [vmem:[#allocation7 + $0x1c] sm:$0xf]
    %v140 = vld [vmem:[#allocation7 + $0x20] sm:$0xf]
    %v141 = vld [vmem:[#allocation7 + $0x24] sm:$0xf]
    %v142 = vld [vmem:[#allocation7 + $0x28] sm:$0xf]
    %v143 = vld [vmem:[#allocation7 + $0x2c] sm:$0xf]
    %v144 = vld [vmem:[#allocation7 + $0x30] sm:$0xf]
    %v145 = vld [vmem:[#allocation7 + $0x34] sm:$0xf]
    %v146 = vld [vmem:[#allocation7 + $0x38] sm:$0xf]
    %v147 = vld [vmem:[#allocation7 + $0x3c] sm:$0xf]
    %v148 = vld [vmem:[%s4] sm:$0x1]
    %v150 = vlaneseq
    %v151 = vshrl.u32 %v150, 7
    %v152 = vsub.s32 0, %v151
    %v153 = vrot.slane %v148, %v152
    %v171 = vunpack.c.l.b16 %v132
    %v172 = vunpack.c.l.b16 %v133
    %v173 = vunpack.c.l.b16 %v134
    %v174 = vunpack.c.l.b16 %v135
    %v175 = vunpack.c.l.b16 %v136
    %v176 = vunpack.c.l.b16 %v137
    %v177 = vunpack.c.l.b16 %v138
    %v178 = vunpack.c.l.b16 %v139
    %v179 = vunpack.c.l.b16 %v140
    %v180 = vunpack.c.l.b16 %v141
    %v181 = vunpack.c.l.b16 %v142
    %v182 = vunpack.c.l.b16 %v143
    %v183 = vunpack.c.l.b16 %v144
    %v184 = vunpack.c.l.b16 %v145
    %v185 = vunpack.c.l.b16 %v146
    %v186 = vunpack.c.l.b16 %v147
    %v187 = vpack.c.b16 %v172, %v171
    %v188 = vpack.c.b16 %v174, %v173
    %v189 = vpack.c.b16 %v176, %v175
    %v190 = vpack.c.b16 %v178, %v177
    %v191 = vpack.c.b16 %v180, %v179
    %v192 = vpack.c.b16 %v182, %v181
    %v193 = vpack.c.b16 %v184, %v183
    %v194 = vpack.c.b16 %v186, %v185
    %203 = vmatprep.subr.bf16.mxu0 0
    %204 = vmatpush1.bf16.msra.mxu0 %v187
    %205 = vmatprep.subr.bf16.mxu0 0
    %206 = vmatpush1.bf16.msra.mxu0 %v188
    %207 = vmatprep.subr.bf16.mxu0 0
    %208 = vmatpush1.bf16.msra.mxu0 %v189
    %209 = vmatprep.subr.bf16.mxu0 0
    %210 = vmatpush1.bf16.msra.mxu0 %v190
    %211 = vmatprep.subr.bf16.mxu0 0
    %212 = vmatpush1.bf16.msra.mxu0 %v191
    %213 = vmatprep.subr.bf16.mxu0 0
    %214 = vmatpush1.bf16.msra.mxu0 %v192
    %215 = vmatprep.subr.bf16.mxu0 0
    %216 = vmatpush1.bf16.msra.mxu0 %v193
    %217 = vmatprep.subr.bf16.mxu0 0
    %218 = vmatpush1.bf16.msra.mxu0 %v194
    %219 = vmatprep.subr.bf16.mxu0 0
    %220 = vmatpush1.bf16.msra.mxu0 0
    %221 = vmatprep.subr.bf16.mxu0 0
    %222 = vmatpush1.bf16.msra.mxu0 0
    %223 = vmatprep.subr.bf16.mxu0 0
    %224 = vmatpush1.bf16.msra.mxu0 0
    %225 = vmatprep.subr.bf16.mxu0 0
    %226 = vmatpush1.bf16.msra.mxu0 0
    %227 = vmatprep.subr.bf16.mxu0 0
    %228 = vmatpush1.bf16.msra.mxu0 0
    %229 = vmatprep.subr.bf16.mxu0 0
    %230 = vmatpush1.bf16.msra.mxu0 0
    %231 = vmatprep.subr.bf16.mxu0 0
    %232 = vmatpush1.bf16.msra.mxu0 0
    %233 = vmatprep.subr.bf16.mxu0 0
    %234 = vmatpush1.bf16.msra.mxu0 0
    %235 = vmatprep.mubr.bf16.mxu0 0
    %236 = vmatmul.mubr.bf16.gmra.mrb[0].mxu0 %v131
    %v237 = vpop.f32.mrb[0].mxu0
    %v238 = vadd.f32 %v153, %v237
    %v239 = vpop.f32.mrb[0].mxu0
    %v240 = vpop.f32.mrb[0].mxu0
    %v241 = vpop.f32.mrb[0].mxu0
    %242 = vdwg.mxu0
    %243 = vst [vmem:[#allocation8] sm:$0x3] %v238
    // Predicated region
    $region34: #{_strategy_logits_jit.1} parent=1 // pred_check
      _
    $region35: #{_strategy_logits_jit.1} parent=1 // pred_check_branch
      %245 = sbr.rel (0) target = $region37
    $region36: #{_strategy_logits_jit.1} parent=1 // pred_region
      %s247 = ssub.s32 32, 32
      %248 = vsyncadd [#allocation4], %s247
      %s250 = sshll.u32 [#allocation8], 4
      %s251 = int_to_ptr.vmem [resolvable:$true] %s250
      %253 = dma.vmem_to_hbm [thread:$0]  %s251, 32, %s5, [#allocation4]
    $region37: #{_strategy_logits_jit.1} parent=1 // pred_fallthru
      _
    // Predicated region
    $region38: #{_strategy_logits_jit.1} parent=1 // pred_check
      _
    $region39: #{_strategy_logits_jit.1} parent=1 // pred_check_branch
      %255 = sbr.rel (0) target = $region41
    $region40: #{_strategy_logits_jit.1} parent=1 // pred_region
      %256 = dma.done [#allocation4], 32
    $region41: #{_strategy_logits_jit.1} parent=1 // pred_fallthru
      _
    %257 = vsyncpa [#allocation3], 1
    %258 = vsyncpa [#allocation6], 1
    %259 = vsyncpa [#allocation4], 1

</llo_original>
